<compile_context>
chip_gen: v5e
topology: v5e:2x2
jax: 0.10.0
libtpu: 0.0.40
codegen_flags: <defaults>
</compile_context>

<pallas_src>
import jax
import jax.numpy as jnp
from jax.experimental import pallas as pl
from jax.experimental.pallas import tpu as pltpu


def _cross_stitch_kernel(
    x_ref,                   # (TB, input_dim)
    w_enc_ref, b_enc_ref,    # (input_dim, 2R), (1, 2R)   packed encoders
    w_h_ref, b_h_ref,        # (2R, 2R), (1, 2R)          alpha folded into heads[0]
    w_p_ref, b_p_ref,        # (2R, Cp), (1, Cp)          phase output (rows R: zero)
    w_q_ref, b_q_ref,        # (2R, Cq), (1, Cq)          pos   output (rows :R zero)
    phase_ref,               # (TB, Cp)
    pos_ref,                 # (TB, Cq)
):
    # Encoder stage: one wide matmul for both encoders, f_cat = [f1 | f2].
    f_cat = jnp.maximum(
        jnp.dot(x_ref[...], w_enc_ref[...], preferred_element_type=jnp.float32)
        + b_enc_ref[...],
        0.0,
    )
    # Hidden stage: cross-stitch mix folded into the weights, h_cat = [h1 | h2].
    h_cat = jnp.maximum(
        jnp.dot(f_cat, w_h_ref[...], preferred_element_type=jnp.float32)
        + b_h_ref[...],
        0.0,
    )
    # Output stage: two narrow heads contracting the full h_cat (zero-extended
    # weights), so no in-kernel lane slicing is needed.
    phase_ref[...] = (
        jnp.dot(h_cat, w_p_ref[...], preferred_element_type=jnp.float32)
        + b_p_ref[...]
    )
    pos_ref[...] = (
        jnp.dot(h_cat, w_q_ref[...], preferred_element_type=jnp.float32)
        + b_q_ref[...]
    )


def cross_stitch_mtl_forward(x, params, *, block_b=2048):
    """Fused CrossStitchMTL forward: returns (phase_logits, pos_logits)."""
    B, input_dim = x.shape
    R = params["w3"].shape[0]          # reduced_dim
    Cp = params["w5"].shape[1]
    Cq = params["w6"].shape[1]
    a = params["alpha"]

    # ---- trace-time packing / folding (recomputed from current params) ----
    # Encoders packed side by side.
    w_enc = jnp.concatenate([params["w1"], params["w2"]], axis=1)      # (in, 2R)
    b_enc = jnp.concatenate([params["b1"], params["b2"]], axis=1)      # (1, 2R)

    # Cross-stitch alpha folded into the first head Linears (exact: the mix is
    # linear, applied after the encoder ReLU and before the head matmul).
    w_h = jnp.concatenate(
        [
            jnp.concatenate([a[0, 0] * params["w3"], a[1, 0] * params["w4"]], axis=1),
            jnp.concatenate([a[0, 1] * params["w3"], a[1, 1] * params["w4"]], axis=1),
        ],
        axis=0,
    )                                                                  # (2R, 2R)
    b_h = jnp.concatenate([params["b3"], params["b4"]], axis=1)        # (1, 2R)

    # Output weights zero-extended over the full 2R hidden concat so the kernel
    # never slices h_cat along the lane axis.
    w_p = jnp.concatenate(
        [params["w5"], jnp.zeros((R, Cp), jnp.float32)], axis=0)       # (2R, Cp)
    w_q = jnp.concatenate(
        [jnp.zeros((R, Cq), jnp.float32), params["w6"]], axis=0)       # (2R, Cq)
    b_p = params["b5"]                                                 # (1, Cp)
    b_q = params["b6"]                                                 # (1, Cq)

    # ---- batch tile selection (no padding; Pallas masks the ragged edge) ----
    block_b = max(8, (block_b // 8) * 8)
    # Keep double-buffered x + output tiles well under the v7x 32 MiB
    # scoped-VMEM default (weights are tiny and broadcast across the grid).
    row_bytes = 4 * (input_dim + Cp + Cq)
    vmem_cap_rows = max(8, ((24 * 1024 * 1024) // (2 * row_bytes) // 8) * 8)
    block_b = min(block_b, vmem_cap_rows)

    if B > block_b:
        TB = block_b                                   # multiple of 8 -> legal
    elif B >= 256:
        # >=2 grid steps so the "parallel" batch axis shards across v7x's 2 TCs.
        TB = ((((B + 1) // 2) + 7) // 8) * 8
    else:
        TB = B                                         # single full-array block
    grid = (pl.cdiv(B, TB),)

    # Advisory cost hint so XLA schedules around the (small) custom call.
    C = Cp + Cq
    flops = 2 * B * (input_dim * 2 * R + (2 * R) * (2 * R) + 2 * R * C)
    bytes_accessed = 4 * (
        B * input_dim + B * C
        + input_dim * 2 * R + 2 * R
        + 4 * R * R + 2 * R
        + 2 * R * C + C
    )

    phase, pos = pl.pallas_call(
        _cross_stitch_kernel,
        out_shape=(
            jax.ShapeDtypeStruct((B, Cp), jnp.float32),
            jax.ShapeDtypeStruct((B, Cq), jnp.float32),
        ),
        grid=grid,
        in_specs=[
            pl.BlockSpec((TB, input_dim), lambda i: (i, 0)),
            pl.BlockSpec((input_dim, 2 * R), lambda i: (0, 0)),
            pl.BlockSpec((1, 2 * R), lambda i: (0, 0)),
            pl.BlockSpec((2 * R, 2 * R), lambda i: (0, 0)),
            pl.BlockSpec((1, 2 * R), lambda i: (0, 0)),
            pl.BlockSpec((2 * R, Cp), lambda i: (0, 0)),
            pl.BlockSpec((1, Cp), lambda i: (0, 0)),
            pl.BlockSpec((2 * R, Cq), lambda i: (0, 0)),
            pl.BlockSpec((1, Cq), lambda i: (0, 0)),
        ],
        out_specs=(
            pl.BlockSpec((TB, Cp), lambda i: (i, 0)),
            pl.BlockSpec((TB, Cq), lambda i: (i, 0)),
        ),
        compiler_params=pltpu.CompilerParams(dimension_semantics=("parallel",)),
        cost_estimate=pl.CostEstimate(
            flops=flops, transcendentals=0, bytes_accessed=bytes_accessed
        ),
    )(x, w_enc, b_enc, w_h, b_h, w_p, b_p, w_q, b_q)

    return phase, pos


def init_params(key, input_dim, hidden_dim, num_phase_classes, num_pos_classes):
    """Deterministic synthetic parameters (shapes match the PyTorch module)."""
    reduced_dim = hidden_dim // 2
    keys = jax.random.split(key, 12)

    def lin(kw, kb, d_in, d_out):
        w = jax.random.normal(kw, (d_in, d_out), jnp.float32) * 0.1
        b = jax.random.normal(kb, (1, d_out), jnp.float32) * 0.1
        return w, b

    w1, b1 = lin(keys[0], keys[1], input_dim, reduced_dim)           # enc_phase
    w2, b2 = lin(keys[2], keys[3], input_dim, reduced_dim)           # enc_pos
    w3, b3 = lin(keys[4], keys[5], reduced_dim, reduced_dim)         # phase_head[0]
    w5, b5 = lin(keys[6], keys[7], reduced_dim, num_phase_classes)   # phase_head[2]
    w4, b4 = lin(keys[8], keys[9], reduced_dim, reduced_dim)         # pos_head[0]
    w6, b6 = lin(keys[10], keys[11], reduced_dim, num_pos_classes)   # pos_head[2]

    alpha = jnp.array([[0.7, 0.3], [0.3, 0.7]], dtype=jnp.float32)

    return {
        "alpha": alpha,
        "w1": w1, "b1": b1, "w2": w2, "b2": b2,
        "w3": w3, "b3": b3, "w5": w5, "b5": b5,
        "w4": w4, "b4": b4, "w6": w6, "b6": b6,
    }


def reference_forward(x, p):
    """Pure-JAX reference mirroring the PyTorch module semantics."""
    f1 = jnp.maximum(x @ p["w1"] + p["b1"], 0.0)
    f2 = jnp.maximum(x @ p["w2"] + p["b2"], 0.0)
    a = p["alpha"]
    f1_cs = a[0, 0] * f1 + a[0, 1] * f2
    f2_cs = a[1, 0] * f1 + a[1, 1] * f2
    h1 = jnp.maximum(f1_cs @ p["w3"] + p["b3"], 0.0)
    phase = h1 @ p["w5"] + p["b5"]
    h2 = jnp.maximum(f2_cs @ p["w4"] + p["b4"], 0.0)
    pos = h2 @ p["w6"] + p["b6"]
    return phase, pos


if __name__ == "__main__":
    batch = 8
    input_dim = 32
    hidden_dim = 32          # reduced_dim = 16
    num_phase_classes = 5
    num_pos_classes = 7

    key = jax.random.PRNGKey(0)
    kx, kp = jax.random.split(key)
    x = jax.random.normal(kx, (batch, input_dim), jnp.float32)
    params = init_params(kp, input_dim, hidden_dim, num_phase_classes, num_pos_classes)

    phase_logits, pos_logits = cross_stitch_mtl_forward(x, params)
    jax.block_until_ready((phase_logits, pos_logits))

    # Correctness check against the pure-JAX reference.
    ref_phase, ref_pos = reference_forward(x, params)
    assert phase_logits.shape == (batch, num_phase_classes)
    assert pos_logits.shape == (batch, num_pos_classes)
    assert jnp.allclose(phase_logits, ref_phase, atol=1e-4, rtol=1e-4)
    assert jnp.allclose(pos_logits, ref_pos, atol=1e-4, rtol=1e-4)

    print("KERNEL_OK")
</pallas_src>

<mosaic_0001>
module attributes {stable_mosaic.version = 11 : i64} {
  func.func @_cross_stitch_kernel(%arg0: i32, %arg1: memref<8x32xf32, #tpu.memory_space<vmem>>, %arg2: memref<32x32xf32, #tpu.memory_space<vmem>>, %arg3: memref<1x32xf32, #tpu.memory_space<vmem>>, %arg4: memref<32x32xf32, #tpu.memory_space<vmem>>, %arg5: memref<1x32xf32, #tpu.memory_space<vmem>>, %arg6: memref<32x5xf32, #tpu.memory_space<vmem>>, %arg7: memref<1x5xf32, #tpu.memory_space<vmem>>, %arg8: memref<32x7xf32, #tpu.memory_space<vmem>>, %arg9: memref<1x7xf32, #tpu.memory_space<vmem>>, %arg10: memref<8x5xf32, #tpu.memory_space<vmem>>, %arg11: memref<8x7xf32, #tpu.memory_space<vmem>>) attributes {dimension_semantics = [#tpu.dimension_semantics<parallel>], iteration_bounds = array<i64: 1>, scalar_prefetch = 0 : i64, scratch_operands = 0 : i64, tpu.core_type = #tpu.core_type<tc>, window_params = [{transform_indices = @transform_0, window_bounds = array<i64: 8, 32>}, {pipeline_mode = #tpu.pipeline_mode<synchronous>, transform_indices = @transform_1, window_bounds = array<i64: 32, 32>}, {pipeline_mode = #tpu.pipeline_mode<synchronous>, transform_indices = @transform_2, window_bounds = array<i64: 1, 32>}, {pipeline_mode = #tpu.pipeline_mode<synchronous>, transform_indices = @transform_3, window_bounds = array<i64: 32, 32>}, {pipeline_mode = #tpu.pipeline_mode<synchronous>, transform_indices = @transform_4, window_bounds = array<i64: 1, 32>}, {pipeline_mode = #tpu.pipeline_mode<synchronous>, transform_indices = @transform_5, window_bounds = array<i64: 32, 5>}, {pipeline_mode = #tpu.pipeline_mode<synchronous>, transform_indices = @transform_6, window_bounds = array<i64: 1, 5>}, {pipeline_mode = #tpu.pipeline_mode<synchronous>, transform_indices = @transform_7, window_bounds = array<i64: 32, 7>}, {pipeline_mode = #tpu.pipeline_mode<synchronous>, transform_indices = @transform_8, window_bounds = array<i64: 1, 7>}, {transform_indices = @transform_9, window_bounds = array<i64: 8, 5>}, {transform_indices = @transform_10, window_bounds = array<i64: 8, 7>}]} {
    %c0 = arith.constant 0 : index
    %c0_0 = arith.constant 0 : index
    %0 = vector.load %arg1[%c0, %c0_0] : memref<8x32xf32, #tpu.memory_space<vmem>>, vector<8x32xf32>
    %c0_1 = arith.constant 0 : index
    %c0_2 = arith.constant 0 : index
    %1 = vector.load %arg2[%c0_1, %c0_2] : memref<32x32xf32, #tpu.memory_space<vmem>>, vector<32x32xf32>
    %cst = arith.constant dense<0.000000e+00> : vector<8x32xf32>
    %2 = tpu.matmul %0, %1, %cst {dimension_numbers = #tpu.dot_dimension_numbers<[1], [0], [0], [1], [0, 0, 1, 1], [], []>} : vector<8x32xf32>, vector<32x32xf32>, vector<8x32xf32> -> vector<8x32xf32>
    %c0_3 = arith.constant 0 : index
    %c0_4 = arith.constant 0 : index
    %3 = vector.load %arg3[%c0_3, %c0_4] : memref<1x32xf32, #tpu.memory_space<vmem>>, vector<1x32xf32>
    %4 = vector.broadcast %3 : vector<1x32xf32> to vector<8x32xf32>
    %5 = arith.addf %2, %4 : vector<8x32xf32>
    %cst_5 = arith.constant 0.000000e+00 : f32
    %6 = vector.broadcast %cst_5 : f32 to vector<8x32xf32>
    %7 = arith.maximumf %5, %6 : vector<8x32xf32>
    %c0_6 = arith.constant 0 : index
    %c0_7 = arith.constant 0 : index
    %8 = vector.load %arg4[%c0_6, %c0_7] : memref<32x32xf32, #tpu.memory_space<vmem>>, vector<32x32xf32>
    %cst_8 = arith.constant dense<0.000000e+00> : vector<8x32xf32>
    %9 = tpu.matmul %7, %8, %cst_8 {dimension_numbers = #tpu.dot_dimension_numbers<[1], [0], [0], [1], [0, 0, 1, 1], [], []>} : vector<8x32xf32>, vector<32x32xf32>, vector<8x32xf32> -> vector<8x32xf32>
    %c0_9 = arith.constant 0 : index
    %c0_10 = arith.constant 0 : index
    %10 = vector.load %arg5[%c0_9, %c0_10] : memref<1x32xf32, #tpu.memory_space<vmem>>, vector<1x32xf32>
    %11 = vector.broadcast %10 : vector<1x32xf32> to vector<8x32xf32>
    %12 = arith.addf %9, %11 : vector<8x32xf32>
    %cst_11 = arith.constant 0.000000e+00 : f32
    %13 = vector.broadcast %cst_11 : f32 to vector<8x32xf32>
    %14 = arith.maximumf %12, %13 : vector<8x32xf32>
    %c0_12 = arith.constant 0 : index
    %c0_13 = arith.constant 0 : index
    %15 = vector.load %arg6[%c0_12, %c0_13] : memref<32x5xf32, #tpu.memory_space<vmem>>, vector<32x5xf32>
    %cst_14 = arith.constant dense<0.000000e+00> : vector<8x5xf32>
    %16 = tpu.matmul %14, %15, %cst_14 {dimension_numbers = #tpu.dot_dimension_numbers<[1], [0], [0], [1], [0, 0, 1, 1], [], []>} : vector<8x32xf32>, vector<32x5xf32>, vector<8x5xf32> -> vector<8x5xf32>
    %c0_15 = arith.constant 0 : index
    %c0_16 = arith.constant 0 : index
    %17 = vector.load %arg7[%c0_15, %c0_16] : memref<1x5xf32, #tpu.memory_space<vmem>>, vector<1x5xf32>
    %18 = vector.broadcast %17 : vector<1x5xf32> to vector<8x5xf32>
    %19 = arith.addf %16, %18 : vector<8x5xf32>
    %c0_17 = arith.constant 0 : index
    %c0_18 = arith.constant 0 : index
    %20 = vector.load %arg10[%c0_17, %c0_18] : memref<8x5xf32, #tpu.memory_space<vmem>>, vector<8x5xf32>
    tpu.vector_store %arg10[%c0_17, %c0_18], %19 {strides = array<i32>} : memref<8x5xf32, #tpu.memory_space<vmem>>, vector<8x5xf32>,
    %c0_19 = arith.constant 0 : index
    %c0_20 = arith.constant 0 : index
    %21 = vector.load %arg8[%c0_19, %c0_20] : memref<32x7xf32, #tpu.memory_space<vmem>>, vector<32x7xf32>
    %cst_21 = arith.constant dense<0.000000e+00> : vector<8x7xf32>
    %22 = tpu.matmul %14, %21, %cst_21 {dimension_numbers = #tpu.dot_dimension_numbers<[1], [0], [0], [1], [0, 0, 1, 1], [], []>} : vector<8x32xf32>, vector<32x7xf32>, vector<8x7xf32> -> vector<8x7xf32>
    %c0_22 = arith.constant 0 : index
    %c0_23 = arith.constant 0 : index
    %23 = vector.load %arg9[%c0_22, %c0_23] : memref<1x7xf32, #tpu.memory_space<vmem>>, vector<1x7xf32>
    %24 = vector.broadcast %23 : vector<1x7xf32> to vector<8x7xf32>
    %25 = arith.addf %22, %24 : vector<8x7xf32>
    %c0_24 = arith.constant 0 : index
    %c0_25 = arith.constant 0 : index
    %26 = vector.load %arg11[%c0_24, %c0_25] : memref<8x7xf32, #tpu.memory_space<vmem>>, vector<8x7xf32>
    tpu.vector_store %arg11[%c0_24, %c0_25], %25 {strides = array<i32>} : memref<8x7xf32, #tpu.memory_space<vmem>>, vector<8x7xf32>,
    return
  }
  func.func @transform_0(%arg0: i32) -> (i32, i32) {
    %c0_i32 = arith.constant 0 : i32
    %c0_i32_0 = arith.constant 0 : i32
    return %arg0, %c0_i32 : i32, i32
  }
  func.func @transform_1(%arg0: i32) -> (i32, i32) {
    %c0_i32 = arith.constant 0 : i32
    %c0_i32_0 = arith.constant 0 : i32
    %c0_i32_1 = arith.constant 0 : i32
    return %c0_i32, %c0_i32_0 : i32, i32
  }
  func.func @transform_2(%arg0: i32) -> (i32, i32) {
    %c0_i32 = arith.constant 0 : i32
    %c0_i32_0 = arith.constant 0 : i32
    %c0_i32_1 = arith.constant 0 : i32
    return %c0_i32, %c0_i32_0 : i32, i32
  }
  func.func @transform_3(%arg0: i32) -> (i32, i32) {
    %c0_i32 = arith.constant 0 : i32
    %c0_i32_0 = arith.constant 0 : i32
    %c0_i32_1 = arith.constant 0 : i32
    return %c0_i32, %c0_i32_0 : i32, i32
  }
  func.func @transform_4(%arg0: i32) -> (i32, i32) {
    %c0_i32 = arith.constant 0 : i32
    %c0_i32_0 = arith.constant 0 : i32
    %c0_i32_1 = arith.constant 0 : i32
    return %c0_i32, %c0_i32_0 : i32, i32
  }
  func.func @transform_5(%arg0: i32) -> (i32, i32) {
    %c0_i32 = arith.constant 0 : i32
    %c0_i32_0 = arith.constant 0 : i32
    %c0_i32_1 = arith.constant 0 : i32
    return %c0_i32, %c0_i32_0 : i32, i32
  }
  func.func @transform_6(%arg0: i32) -> (i32, i32) {
    %c0_i32 = arith.constant 0 : i32
    %c0_i32_0 = arith.constant 0 : i32
    %c0_i32_1 = arith.constant 0 : i32
    return %c0_i32, %c0_i32_0 : i32, i32
  }
  func.func @transform_7(%arg0: i32) -> (i32, i32) {
    %c0_i32 = arith.constant 0 : i32
    %c0_i32_0 = arith.constant 0 : i32
    %c0_i32_1 = arith.constant 0 : i32
    return %c0_i32, %c0_i32_0 : i32, i32
  }
  func.func @transform_8(%arg0: i32) -> (i32, i32) {
    %c0_i32 = arith.constant 0 : i32
    %c0_i32_0 = arith.constant 0 : i32
    %c0_i32_1 = arith.constant 0 : i32
    return %c0_i32, %c0_i32_0 : i32, i32
  }
  func.func @transform_9(%arg0: i32) -> (i32, i32) {
    %c0_i32 = arith.constant 0 : i32
    %c0_i32_0 = arith.constant 0 : i32
    return %arg0, %c0_i32 : i32, i32
  }
  func.func @transform_10(%arg0: i32) -> (i32, i32) {
    %c0_i32 = arith.constant 0 : i32
    %c0_i32_0 = arith.constant 0 : i32
    return %arg0, %c0_i32 : i32, i32
  }
}

</mosaic_0001>

<llo_original>
// kernel: tpu_custom_call.1
$region0: #{tpu_custom_call.1}
  #allocation0 [shape = 'u32[]', space=smem, size = 0x4, offset = 0x4, fixed_abs, tag = 'smem constant byte address 0x4 - core index']
  #allocation1 [shape = 'u32[72,128]{1,0:T(1,128)}', space=vmem, size = 0x9000, scoped, tag = 'internal scratch']
  %s0 = inlined_call_operand.vmem [shape: f32[8,32], index: 0, kind: input, shape index: {}]
  %s1 = inlined_call_operand.vmem [shape: f32[32,32], index: 1, kind: input, shape index: {}]
  %s2 = inlined_call_operand.vmem [shape: f32[1,32], index: 2, kind: input, shape index: {}]
  %s3 = inlined_call_operand.vmem [shape: f32[32,32], index: 3, kind: input, shape index: {}]
  %s4 = inlined_call_operand.vmem [shape: f32[1,32], index: 4, kind: input, shape index: {}]
  %s5 = inlined_call_operand.vmem [shape: f32[32,5], index: 5, kind: input, shape index: {}]
  %s6 = inlined_call_operand.vmem [shape: f32[1,5], index: 6, kind: input, shape index: {}]
  %s7 = inlined_call_operand.vmem [shape: f32[32,7], index: 7, kind: input, shape index: {}]
  %s8 = inlined_call_operand.vmem [shape: f32[1,7], index: 8, kind: input, shape index: {}]
  %s9 = inlined_call_operand.hbm [shape: f32[8,5], index: 9, kind: output, shape index: {0}]
  %s10 = inlined_call_operand.hbm [shape: f32[8,7], index: 10, kind: output, shape index: {1}]
  %11 = xla_tuple %s9, %s10
  %s12 = sld [smem:[#allocation0]]
  $region54: #{tpu_custom_call.1} parent=0
    _
  %s14 = ssub.s32 1, %s12
  %s15 = scalar_select 0, %s14, %s12
  $region1: #{tpu_custom_call.1} parent=0
    #allocation2 [shape = 'u8[4096]{0}', space=vmem, size = 0x1000, scoped, tag = 'output window, operand 0, single buffered']
    #allocation3 [shape = 's32[1]{0}', space=sflag, size = 0x4, scoped, tag = 'scoped memory for tpu_custom_call.1']
    #allocation4 [shape = 'u8[4096]{0}', space=vmem, size = 0x1000, scoped, tag = 'output window, operand 1, single buffered']
    #allocation5 [shape = 's32[1]{0}', space=sflag, size = 0x4, scoped, tag = 'scoped memory for tpu_custom_call.1']
    %16 = vsyncpa [#allocation3], 0
    %17 = vsyncpa [#allocation5], 0
    // Predicated region
    $region2: #{tpu_custom_call.1} parent=1 // pred_check
      _
    $region3: #{tpu_custom_call.1} parent=1 // pred_check_branch
      %19 = sbr.rel (0) target = $region5
    $region4: #{tpu_custom_call.1} parent=1 // pred_region
      _
    $region5: #{tpu_custom_call.1} parent=1 // pred_fallthru
      _
    // Predicated region
    $region6: #{tpu_custom_call.1} parent=1 // pred_check
      _
    $region7: #{tpu_custom_call.1} parent=1 // pred_check_branch
      %21 = sbr.rel (0) target = $region9
    $region8: #{tpu_custom_call.1} parent=1 // pred_region
      _
    $region9: #{tpu_custom_call.1} parent=1 // pred_fallthru
      _
    // Predicated region
    $region10: #{tpu_custom_call.1} parent=1 // pred_check
      _
    $region11: #{tpu_custom_call.1} parent=1 // pred_check_branch
      %23 = sbr.rel (0) target = $region13
    $region12: #{tpu_custom_call.1} parent=1 // pred_region
      _
    $region13: #{tpu_custom_call.1} parent=1 // pred_fallthru
      _
    // Predicated region
    $region14: #{tpu_custom_call.1} parent=1 // pred_check
      _
    $region15: #{tpu_custom_call.1} parent=1 // pred_check_branch
      %25 = sbr.rel (0) target = $region17
    $region16: #{tpu_custom_call.1} parent=1 // pred_region
      _
    $region17: #{tpu_custom_call.1} parent=1 // pred_fallthru
      _
    // Predicated region
    $region18: #{tpu_custom_call.1} parent=1 // pred_check
      _
    $region19: #{tpu_custom_call.1} parent=1 // pred_check_branch
      %27 = sbr.rel (0) target = $region21
    $region20: #{tpu_custom_call.1} parent=1 // pred_region
      _
    $region21: #{tpu_custom_call.1} parent=1 // pred_fallthru
      _
    // Predicated region
    $region22: #{tpu_custom_call.1} parent=1 // pred_check
      _
    $region23: #{tpu_custom_call.1} parent=1 // pred_check_branch
      %29 = sbr.rel (0) target = $region25
    $region24: #{tpu_custom_call.1} parent=1 // pred_region
      _
    $region25: #{tpu_custom_call.1} parent=1 // pred_fallthru
      _
    // Predicated region
    $region26: #{tpu_custom_call.1} parent=1 // pred_check
      _
    $region27: #{tpu_custom_call.1} parent=1 // pred_check_branch
      %31 = sbr.rel (0) target = $region29
    $region28: #{tpu_custom_call.1} parent=1 // pred_region
      _
    $region29: #{tpu_custom_call.1} parent=1 // pred_fallthru
      _
    // Predicated region
    $region30: #{tpu_custom_call.1} parent=1 // pred_check
      _
    $region31: #{tpu_custom_call.1} parent=1 // pred_check_branch
      %33 = sbr.rel (0) target = $region33
    $region32: #{tpu_custom_call.1} parent=1 // pred_region
      _
    $region33: #{tpu_custom_call.1} parent=1 // pred_fallthru
      _
    // Predicated region
    $region34: #{tpu_custom_call.1} parent=1 // pred_check
      _
    $region35: #{tpu_custom_call.1} parent=1 // pred_check_branch
      %35 = sbr.rel (0) target = $region37
    $region36: #{tpu_custom_call.1} parent=1 // pred_region
      _
    $region37: #{tpu_custom_call.1} parent=1 // pred_fallthru
      _
    %v36 = vld [vmem:[%s0] sm:$0xff]
    %v37 = vld [vmem:[%s1] sm:$0xff]
    %v38 = vld [vmem:[%s1 + $0x8] sm:$0xff]
    %v39 = vld [vmem:[%s1 + $0x10] sm:$0xff]
    %v40 = vld [vmem:[%s1 + $0x18] sm:$0xff]
    %v41 = vld [vmem:[%s2] sm:$0x1]
    %v43 = vperm.slane %v41, 0
    %vm45 = vcmask 261120
    %v47 = vsel %vm45, %v36, 0
    %49 = vmatpush.msra.mxu0 0.0
    %50 = vmatpush.msra.mxu0 0.0
    %51 = vmatpush.msra.mxu0 0.0
    %52 = vmatpush.msra.mxu0 0.0
    %53 = vmatpush.msra.mxu0 0.0
    %54 = vmatpush.msra.mxu0 0.0
    %55 = vmatpush.msra.mxu0 0.0
    %56 = vmatpush.msra.mxu0 0.0
    %57 = vmatpush.msra.mxu0 0.0
    %58 = vmatpush.msra.mxu0 0.0
    %59 = vmatpush.msra.mxu0 0.0
    %60 = vmatpush.msra.mxu0 0.0
    %61 = vmatpush.msra.mxu0 %v40
    %62 = vmatpush.msra.mxu0 %v39
    %63 = vmatpush.msra.mxu0 %v38
    %64 = vmatpush.msra.mxu0 %v37
    %65 = vmatmul.f32.gmra.mxu0 %v47
    %v66 = vpop.f32.mrf.mxu0
    %v67 = vadd.f32 %v43, %v66
    %68 = vdwg.mxu0
    %v69 = vmax.f32 %v67, 0.0
    %v70 = vld [vmem:[%s3] sm:$0xff]
    %v71 = vld [vmem:[%s3 + $0x8] sm:$0xff]
    %v72 = vld [vmem:[%s3 + $0x10] sm:$0xff]
    %v73 = vld [vmem:[%s3 + $0x18] sm:$0xff]
    %v74 = vld [vmem:[%s4] sm:$0x1]
    %v76 = vperm.slane %v74, 0
    %v79 = vsel %vm45, %v69, 0
    %81 = vmatpush.msra.mxu0 0.0
    %82 = vmatpush.msra.mxu0 0.0
    %83 = vmatpush.msra.mxu0 0.0
    %84 = vmatpush.msra.mxu0 0.0
    %85 = vmatpush.msra.mxu0 0.0
    %86 = vmatpush.msra.mxu0 0.0
    %87 = vmatpush.msra.mxu0 0.0
    %88 = vmatpush.msra.mxu0 0.0
    %89 = vmatpush.msra.mxu0 0.0
    %90 = vmatpush.msra.mxu0 0.0
    %91 = vmatpush.msra.mxu0 0.0
    %92 = vmatpush.msra.mxu0 0.0
    %93 = vmatpush.msra.mxu0 %v73
    %94 = vmatpush.msra.mxu0 %v72
    %95 = vmatpush.msra.mxu0 %v71
    %96 = vmatpush.msra.mxu0 %v70
    %97 = vmatmul.f32.gmra.mxu0 %v79
    %v98 = vpop.f32.mrf.mxu0
    %v99 = vadd.f32 %v76, %v98
    %100 = vdwg.mxu0
    %v101 = vmax.f32 %v99, 0.0
    %v102 = vld [vmem:[%s5] sm:$0xff]
    %v103 = vld [vmem:[%s5 + $0x8] sm:$0xff]
    %v104 = vld [vmem:[%s5 + $0x10] sm:$0xff]
    %v105 = vld [vmem:[%s5 + $0x18] sm:$0xff]
    %v106 = vld [vmem:[%s6] sm:$0x1]
    %v108 = vperm.slane %v106, 0
    %v111 = vsel %vm45, %v101, 0
    %113 = vmatpush.msra.mxu0 0.0
    %114 = vmatpush.msra.mxu0 0.0
    %115 = vmatpush.msra.mxu0 0.0
    %116 = vmatpush.msra.mxu0 0.0
    %117 = vmatpush.msra.mxu0 0.0
    %118 = vmatpush.msra.mxu0 0.0
    %119 = vmatpush.msra.mxu0 0.0
    %120 = vmatpush.msra.mxu0 0.0
    %121 = vmatpush.msra.mxu0 0.0
    %122 = vmatpush.msra.mxu0 0.0
    %123 = vmatpush.msra.mxu0 0.0
    %124 = vmatpush.msra.mxu0 0.0
    %125 = vmatpush.msra.mxu0 %v105
    %126 = vmatpush.msra.mxu0 %v104
    %127 = vmatpush.msra.mxu0 %v103
    %128 = vmatpush.msra.mxu0 %v102
    %129 = vmatmul.f32.gmra.mxu0 %v111
    %v130 = vpop.f32.mrf.mxu0
    %v131 = vadd.f32 %v108, %v130
    %132 = vdwg.mxu0
    %vm133 = vcmask 39936
    %134 = vst.msk [vmem:[#allocation2] sm:$0xff] %vm133, %v131
    %v135 = vld [vmem:[%s7] sm:$0xff]
    %v136 = vld [vmem:[%s7 + $0x8] sm:$0xff]
    %v137 = vld [vmem:[%s7 + $0x10] sm:$0xff]
    %v138 = vld [vmem:[%s7 + $0x18] sm:$0xff]
    %v139 = vld [vmem:[%s8] sm:$0x1]
    %v141 = vperm.slane %v139, 0
    %143 = vmatpush.msra.mxu0 0.0
    %144 = vmatpush.msra.mxu0 0.0
    %145 = vmatpush.msra.mxu0 0.0
    %146 = vmatpush.msra.mxu0 0.0
    %147 = vmatpush.msra.mxu0 0.0
    %148 = vmatpush.msra.mxu0 0.0
    %149 = vmatpush.msra.mxu0 0.0
    %150 = vmatpush.msra.mxu0 0.0
    %151 = vmatpush.msra.mxu0 0.0
    %152 = vmatpush.msra.mxu0 0.0
    %153 = vmatpush.msra.mxu0 0.0
    %154 = vmatpush.msra.mxu0 0.0
    %155 = vmatpush.msra.mxu0 %v138
    %156 = vmatpush.msra.mxu0 %v137
    %157 = vmatpush.msra.mxu0 %v136
    %158 = vmatpush.msra.mxu0 %v135
    %159 = vmatmul.f32.gmra.mxu0 %v111
    %v160 = vpop.f32.mrf.mxu0
    %v161 = vadd.f32 %v141, %v160
    %162 = vdwg.mxu0
    %vm163 = vcmask 56320
    %164 = vst.msk [vmem:[#allocation4] sm:$0xff] %vm163, %v161
    // Predicated region
    $region38: #{tpu_custom_call.1} parent=1 // pred_check
      _
    $region39: #{tpu_custom_call.1} parent=1 // pred_check_branch
      %166 = sbr.rel (0) target = $region41
    $region40: #{tpu_custom_call.1} parent=1 // pred_region
      %168 = vsyncadd [#allocation3], 0
      %s170 = sshll.u32 [#allocation2], 4
      %s171 = int_to_ptr.vmem [resolvable:$true] %s170
      %s172 = sshll.u32 %s9, 4
      %s173 = int_to_ptr.hbm [resolvable:$true] %s172
      %175 = dma.vmem_to_hbm [thread:$0]  %s171, 128, %s173, [#allocation3]
    $region41: #{tpu_custom_call.1} parent=1 // pred_fallthru
      _
    // Predicated region
    $region42: #{tpu_custom_call.1} parent=1 // pred_check
      _
    $region43: #{tpu_custom_call.1} parent=1 // pred_check_branch
      %177 = sbr.rel (0) target = $region45
    $region44: #{tpu_custom_call.1} parent=1 // pred_region
      %179 = vsyncadd [#allocation5], 0
      %s181 = sshll.u32 [#allocation4], 4
      %s182 = int_to_ptr.vmem [resolvable:$true] %s181
      %s183 = sshll.u32 %s10, 4
      %s184 = int_to_ptr.hbm [resolvable:$true] %s183
      %186 = dma.vmem_to_hbm [thread:$0]  %s182, 128, %s184, [#allocation5]
    $region45: #{tpu_custom_call.1} parent=1 // pred_fallthru
      _
    // Predicated region
    $region46: #{tpu_custom_call.1} parent=1 // pred_check
      _
    $region47: #{tpu_custom_call.1} parent=1 // pred_check_branch
      %188 = sbr.rel (0) target = $region49
    $region48: #{tpu_custom_call.1} parent=1 // pred_region
      %190 = dma.done [#allocation3], 128
    $region49: #{tpu_custom_call.1} parent=1 // pred_fallthru
      _
    // Predicated region
    $region50: #{tpu_custom_call.1} parent=1 // pred_check
      _
    $region51: #{tpu_custom_call.1} parent=1 // pred_check_branch
      %192 = sbr.rel (0) target = $region53
    $region52: #{tpu_custom_call.1} parent=1 // pred_region
      %194 = dma.done [#allocation5], 128
    $region53: #{tpu_custom_call.1} parent=1 // pred_fallthru
      _
    %195 = vsyncpa [#allocation3], 1
    %196 = vsyncpa [#allocation5], 1

</llo_original>
